<compile_context>
chip_gen: v5e
topology: v5e:2x2
jax: 0.10.0
libtpu: 0.0.40
codegen_flags: <defaults>
</compile_context>

<pallas_src>
import numpy as np
import jax
import jax.numpy as jnp
from jax.experimental import pallas as pl
from jax.experimental.pallas import tpu as pltpu


WS = 11                 # window_size
C2 = 0.03 ** 2          # c2 ** 2 from __init__


def _gauss1d(ws):
    sigma = ws / 6.0
    xs = np.arange(ws)
    g = np.exp(-((xs - ws // 2) ** 2) / (2.0 * sigma ** 2))
    return (g / g.sum()).astype(np.float32)


def _band_matrix(n, ws=WS):
    """Banded Gaussian matrix implementing a 1-D SAME conv with zero padding.

    m[i, j] = g[j - i + pad] for |j - i| <= pad (g is symmetric), so
    out = m @ x (H direction) and out = x @ m (W direction).
    """
    g = _gauss1d(ws)
    pad = ws // 2
    m = np.zeros((n, n), np.float32)
    for i in range(n):
        for j in range(max(0, i - pad), min(n, i + pad + 1)):
            m[i, j] = g[j - i + pad]
    return m


def make_mef_ssim_kernel(C, H, W, c2=C2):
    inv_hw = 1.0 / float(H * W)

    def kernel(x_ref, ys_ref, gh_ref, gw_ref, o_ref,
               stat_ref, mux_ref, sigx_ref, bsig_ref, bcs_ref):
        k = pl.program_id(0)
        gh = gh_ref[...]            # (H, H) banded Gaussian, already scaled by 1/C
        gw = gw_ref[...]            # (W, W) banded Gaussian
        x = x_ref[...]              # (C, H, W) reference image (resident)
        yk = ys_ref[0]              # (C, H, W) current exposure (one per grid step)

        def sep_conv(stacked, n):
            # stacked: (n*H, W), n channel-reduced planes along the sublane dim.
            # W (lane) pass: one matmul with all planes folded into M.
            tw = jnp.dot(stacked, gw, preferred_element_type=jnp.float32)
            # H (sublane) pass: one batched contraction (no per-plane Python loop).
            return jnp.einsum('nij,njw->niw',
                              jnp.broadcast_to(gh[None], (n, H, H)),
                              tw.reshape(n, H, W),
                              preferred_element_type=jnp.float32)   # (n, H, W)

        # ---- one-time X statistics + running-state init (k == 0) ----
        @pl.when(k == 0)
        def _init():
            s_x = x[0]
            s_xx = x[0] * x[0]
            for c in range(1, C):
                s_x = s_x + x[c]
                s_xx = s_xx + x[c] * x[c]
            stat_ref[pl.ds(0 * H, H), :] = s_x
            stat_ref[pl.ds(1 * H, H), :] = s_xx
            cx = sep_conv(stat_ref[pl.ds(0, 2 * H), :], 2)
            mu_x = cx[0]
            mux_ref[...] = mu_x
            sigx_ref[...] = cx[1] - mu_x * mu_x
            bsig_ref[...] = jnp.full((H, W), -jnp.inf, dtype=jnp.float32)
            bcs_ref[...] = jnp.zeros((H, W), dtype=jnp.float32)

        # ---- per-exposure channel-reduced statistic planes -> VMEM scratch ----
        s_y = yk[0]
        s_yy = yk[0] * yk[0]
        s_xy = x[0] * yk[0]
        for c in range(1, C):
            yc = yk[c]
            s_y = s_y + yc
            s_yy = s_yy + yc * yc
            s_xy = s_xy + x[c] * yc
        stat_ref[pl.ds(0 * H, H), :] = s_y
        stat_ref[pl.ds(1 * H, H), :] = s_yy
        stat_ref[pl.ds(2 * H, H), :] = s_xy

        conv = sep_conv(stat_ref[...], 3)       # (3, H, W)
        mu_y = conv[0]
        sig_y = conv[1] - mu_y * mu_y
        mu_x = mux_ref[...]
        sig_xy = conv[2] - mu_x * mu_y

        # cs_k with the EUP reciprocal (approx ~2^-12 rel error, within budget).
        cs_k = (2.0 * sig_xy + c2) * pl.reciprocal(sigx_ref[...] + sig_y + c2,
                                                   approx=True)

        # torch.max(dim=0) + torch.gather == first-occurrence argmax select,
        # implemented as a running strict-">" select carried across the K grid.
        take = sig_y > bsig_ref[...]
        bcs_ref[...] = jnp.where(take, cs_k, bcs_ref[...])
        bsig_ref[...] = jnp.where(take, sig_y, bsig_ref[...])

        # l_map == 1.0 on the is_lum=False path -> q = mean(cs_map)
        @pl.when(k == pl.num_programs(0) - 1)
        def _finalize():
            q = jnp.sum(bcs_ref[...]) * inv_hw
            o_ref[...] = jnp.broadcast_to(q, (1, 1))

    return kernel


def mef_msssim_pallas(X, Ys, ws=WS, c2=C2):
    """X: (1, C, H, W), Ys: (K, C, H, W) float32 -> MEF-MS-SSIM score (default path)."""
    K, C, H, W = Ys.shape
    kernel = make_mef_ssim_kernel(C, H, W, c2=c2)
    # Fold the create_window "window /= channel" scale into the H-pass matrix.
    gh = jnp.asarray((_band_matrix(H, ws) / float(C)).astype(np.float32))
    gw = jnp.asarray(_band_matrix(W, ws))

    grid_spec = pltpu.PrefetchScalarGridSpec(
        num_scalar_prefetch=0,
        grid=(K,),
        in_specs=[
            pl.BlockSpec((C, H, W), lambda k: (0, 0, 0)),         # X (resident)
            pl.BlockSpec((1, C, H, W), lambda k: (k, 0, 0, 0)),   # one exposure/step
            pl.BlockSpec((H, H), lambda k: (0, 0)),               # Gh (scaled 1/C)
            pl.BlockSpec((W, W), lambda k: (0, 0)),               # Gw
        ],
        out_specs=pl.BlockSpec((1, 1), lambda k: (0, 0)),
        scratch_shapes=[
            pltpu.VMEM((3 * H, W), jnp.float32),   # stacked statistic planes
            pltpu.VMEM((H, W), jnp.float32),       # mu_x
            pltpu.VMEM((H, W), jnp.float32),       # sigma_x^2
            pltpu.VMEM((H, W), jnp.float32),       # running max sigma_y^2
            pltpu.VMEM((H, W), jnp.float32),       # running selected cs
        ],
    )

    cs = pl.pallas_call(
        kernel,
        out_shape=jax.ShapeDtypeStruct((1, 1), jnp.float32),
        grid_spec=grid_spec,
        compiler_params=pltpu.CompilerParams(
            dimension_semantics=("arbitrary",),           # K carries running state
            vmem_limit_bytes=32 * 1024 * 1024),
    )(X[0].astype(jnp.float32), Ys.astype(jnp.float32), gh, gw)[0, 0]

    # mef_msssim: levels = len(beta) = 1, beta = [1.], is_lum=False  =>  l = 1.0
    # result = Ql[-1] ** beta[-1] * prod(Qcs ** beta) = 1.0 * cs
    return cs


def mef_msssim_ref(X, Ys, ws=WS, c2=C2):
    """Pure-JAX reference mirroring the PyTorch MEF_MSSSIM default forward path."""
    K, C, H, W = Ys.shape
    g = jnp.asarray(_gauss1d(ws))
    window = jnp.tile(jnp.outer(g, g)[None, None] / C, (1, C, 1, 1))  # (1,C,ws,ws)
    pad = ws // 2

    def conv(a):  # (N,C,H,W) -> (N,H,W)
        out = jax.lax.conv_general_dilated(
            a.astype(jnp.float32), window, (1, 1),
            [(pad, pad), (pad, pad)],
            dimension_numbers=("NCHW", "OIHW", "NCHW"),
            precision=jax.lax.Precision.HIGHEST)
        return out[:, 0]

    muY = conv(Ys)
    sigY = conv(Ys * Ys) - muY * muY
    muX = conv(X)[0]
    sigX = conv(X * X)[0] - muX * muX
    sigXY = conv(X * Ys) - muX[None] * muY
    cs_seq = (2.0 * sigXY + c2) / (sigX[None] + sigY + c2)
    idx = jnp.argmax(sigY, axis=0)
    cs = jnp.mean(jnp.take_along_axis(cs_seq, idx[None], axis=0)[0])
    return 1.0 * cs   # l = 1.0, levels = 1, beta = 1


if __name__ == "__main__":
    key = jax.random.PRNGKey(0)
    kx, ky = jax.random.split(key)
    # batch=1 reference image, K=3 exposures, channels=3, spatial=16x16
    X = jax.random.uniform(kx, (1, 3, 16, 16), dtype=jnp.float32)
    Ys = jax.random.uniform(ky, (3, 3, 16, 16), dtype=jnp.float32)

    q = mef_msssim_pallas(X, Ys)
    jax.block_until_ready(q)

    q_ref = mef_msssim_ref(X, Ys)
    # Tolerance widened to 1e-3 to cover the ~2^-12 relative error of the
    # approximate EUP reciprocal used for the cs denominator.
    np.testing.assert_allclose(np.asarray(q), np.asarray(q_ref), rtol=1e-3, atol=1e-3)

    print("KERNEL_OK")
</pallas_src>

<mosaic_0001>
module attributes {stable_mosaic.version = 11 : i64} {
  func.func @kernel(%arg0: i32, %arg1: memref<3x16x16xf32, #tpu.memory_space<vmem>>, %arg2: memref<1x3x16x16xf32, #tpu.memory_space<vmem>>, %arg3: memref<16x16xf32, #tpu.memory_space<vmem>>, %arg4: memref<16x16xf32, #tpu.memory_space<vmem>>, %arg5: memref<1x1xf32, #tpu.memory_space<vmem>>, %arg6: memref<48x16xf32, #tpu.memory_space<vmem>>, %arg7: memref<16x16xf32, #tpu.memory_space<vmem>>, %arg8: memref<16x16xf32, #tpu.memory_space<vmem>>, %arg9: memref<16x16xf32, #tpu.memory_space<vmem>>, %arg10: memref<16x16xf32, #tpu.memory_space<vmem>>) attributes {dimension_semantics = [#tpu.dimension_semantics<arbitrary>], iteration_bounds = array<i64: 3>, scalar_prefetch = 0 : i64, scratch_operands = 5 : i64, tpu.core_type = #tpu.core_type<tc>, window_params = [{pipeline_mode = #tpu.pipeline_mode<synchronous>, transform_indices = @transform_0, window_bounds = array<i64: 3, 16, 16>}, {transform_indices = @transform_1, window_bounds = array<i64: 1, 3, 16, 16>}, {pipeline_mode = #tpu.pipeline_mode<synchronous>, transform_indices = @transform_2, window_bounds = array<i64: 16, 16>}, {pipeline_mode = #tpu.pipeline_mode<synchronous>, transform_indices = @transform_3, window_bounds = array<i64: 16, 16>}, {pipeline_mode = #tpu.pipeline_mode<synchronous>, transform_indices = @transform_4, window_bounds = array<i64: 1, 1>}]} {
    %c0 = arith.constant 0 : index
    %c0_0 = arith.constant 0 : index
    %0 = vector.load %arg3[%c0, %c0_0] : memref<16x16xf32, #tpu.memory_space<vmem>>, vector<16x16xf32>
    %c0_1 = arith.constant 0 : index
    %c0_2 = arith.constant 0 : index
    %1 = vector.load %arg4[%c0_1, %c0_2] : memref<16x16xf32, #tpu.memory_space<vmem>>, vector<16x16xf32>
    %c0_3 = arith.constant 0 : index
    %c0_4 = arith.constant 0 : index
    %c0_5 = arith.constant 0 : index
    %2 = vector.load %arg1[%c0_3, %c0_4, %c0_5] : memref<3x16x16xf32, #tpu.memory_space<vmem>>, vector<3x16x16xf32>
    %c0_6 = arith.constant 0 : index
    %c0_7 = arith.constant 0 : index
    %c0_8 = arith.constant 0 : index
    %c0_9 = arith.constant 0 : index
    %3 = vector.load %arg2[%c0_6, %c0_7, %c0_8, %c0_9] : memref<1x3x16x16xf32, #tpu.memory_space<vmem>>, vector<1x3x16x16xf32>
    %4 = vector.shape_cast %3 : vector<1x3x16x16xf32> to vector<3x16x16xf32>
    %c0_i32 = arith.constant 0 : i32
    %5 = arith.cmpi eq, %arg0, %c0_i32 : i32
    %6 = arith.extui %5 : i1 to i32
    %c0_i32_10 = arith.constant 0 : i32
    %7 = arith.cmpi ne, %6, %c0_i32_10 : i32
    scf.if %7 {
      %80 = vector.extract_strided_slice %2 {offsets = [0, 0, 0], sizes = [1, 16, 16], strides = [1, 1, 1]} : vector<3x16x16xf32> to vector<1x16x16xf32>
      %81 = vector.shape_cast %80 : vector<1x16x16xf32> to vector<16x16xf32>
      %82 = vector.extract_strided_slice %2 {offsets = [0, 0, 0], sizes = [1, 16, 16], strides = [1, 1, 1]} : vector<3x16x16xf32> to vector<1x16x16xf32>
      %83 = vector.shape_cast %82 : vector<1x16x16xf32> to vector<16x16xf32>
      %84 = vector.extract_strided_slice %2 {offsets = [0, 0, 0], sizes = [1, 16, 16], strides = [1, 1, 1]} : vector<3x16x16xf32> to vector<1x16x16xf32>
      %85 = vector.shape_cast %84 : vector<1x16x16xf32> to vector<16x16xf32>
      %86 = arith.mulf %83, %85 : vector<16x16xf32>
      %87 = vector.extract_strided_slice %2 {offsets = [1, 0, 0], sizes = [1, 16, 16], strides = [1, 1, 1]} : vector<3x16x16xf32> to vector<1x16x16xf32>
      %88 = vector.shape_cast %87 : vector<1x16x16xf32> to vector<16x16xf32>
      %89 = arith.addf %81, %88 : vector<16x16xf32>
      %90 = vector.extract_strided_slice %2 {offsets = [1, 0, 0], sizes = [1, 16, 16], strides = [1, 1, 1]} : vector<3x16x16xf32> to vector<1x16x16xf32>
      %91 = vector.shape_cast %90 : vector<1x16x16xf32> to vector<16x16xf32>
      %92 = vector.extract_strided_slice %2 {offsets = [1, 0, 0], sizes = [1, 16, 16], strides = [1, 1, 1]} : vector<3x16x16xf32> to vector<1x16x16xf32>
      %93 = vector.shape_cast %92 : vector<1x16x16xf32> to vector<16x16xf32>
      %94 = arith.mulf %91, %93 : vector<16x16xf32>
      %95 = arith.addf %86, %94 : vector<16x16xf32>
      %96 = vector.extract_strided_slice %2 {offsets = [2, 0, 0], sizes = [1, 16, 16], strides = [1, 1, 1]} : vector<3x16x16xf32> to vector<1x16x16xf32>
      %97 = vector.shape_cast %96 : vector<1x16x16xf32> to vector<16x16xf32>
      %98 = arith.addf %89, %97 : vector<16x16xf32>
      %99 = vector.extract_strided_slice %2 {offsets = [2, 0, 0], sizes = [1, 16, 16], strides = [1, 1, 1]} : vector<3x16x16xf32> to vector<1x16x16xf32>
      %100 = vector.shape_cast %99 : vector<1x16x16xf32> to vector<16x16xf32>
      %101 = vector.extract_strided_slice %2 {offsets = [2, 0, 0], sizes = [1, 16, 16], strides = [1, 1, 1]} : vector<3x16x16xf32> to vector<1x16x16xf32>
      %102 = vector.shape_cast %101 : vector<1x16x16xf32> to vector<16x16xf32>
      %103 = arith.mulf %100, %102 : vector<16x16xf32>
      %104 = arith.addf %95, %103 : vector<16x16xf32>
      %c0_36 = arith.constant 0 : index
      %c0_37 = arith.constant 0 : index
      %105 = vector.load %arg6[%c0_36, %c0_37] : memref<48x16xf32, #tpu.memory_space<vmem>>, vector<16x16xf32>
      tpu.vector_store %arg6[%c0_36, %c0_37], %98 {strides = array<i32>} : memref<48x16xf32, #tpu.memory_space<vmem>>, vector<16x16xf32>,
      %c16_38 = arith.constant 16 : index
      %c0_39 = arith.constant 0 : index
      %106 = vector.load %arg6[%c16_38, %c0_39] : memref<48x16xf32, #tpu.memory_space<vmem>>, vector<16x16xf32>
      tpu.vector_store %arg6[%c16_38, %c0_39], %104 {strides = array<i32>} : memref<48x16xf32, #tpu.memory_space<vmem>>, vector<16x16xf32>,
      %c0_40 = arith.constant 0 : index
      %c0_41 = arith.constant 0 : index
      %107 = vector.load %arg6[%c0_40, %c0_41] : memref<48x16xf32, #tpu.memory_space<vmem>>, vector<32x16xf32>
      %cst_42 = arith.constant dense<0.000000e+00> : vector<32x16xf32>
      %108 = tpu.matmul %107, %1, %cst_42 {dimension_numbers = #tpu.dot_dimension_numbers<[1], [0], [0], [1], [0, 0, 1, 1], [], []>} : vector<32x16xf32>, vector<16x16xf32>, vector<32x16xf32> -> vector<32x16xf32>
      %109 = vector.shape_cast %0 : vector<16x16xf32> to vector<1x16x16xf32>
      %110 = vector.shape_cast %109 : vector<1x16x16xf32> to vector<1x16x16xf32>
      %111 = vector.broadcast %110 : vector<1x16x16xf32> to vector<2x16x16xf32>
      %112 = vector.shape_cast %108 : vector<32x16xf32> to vector<2x16x16xf32>
      "tpu.trace_start"() <{level = 10 : i32, message = "nij,njw->niw"}> : () -> ()
      %cst_43 = arith.constant dense<0.000000e+00> : vector<2x16x16xf32>
      %113 = tpu.matmul %111, %112, %cst_43 {dimension_numbers = #tpu.dot_dimension_numbers<[2], [1], [1], [2], [0, 0, 0, 1, 1, 2], [0], [0]>} : vector<2x16x16xf32>, vector<2x16x16xf32>, vector<2x16x16xf32> -> vector<2x16x16xf32>
      "tpu.trace_stop"() : () -> ()
      %114 = vector.extract_strided_slice %113 {offsets = [0, 0, 0], sizes = [1, 16, 16], strides = [1, 1, 1]} : vector<2x16x16xf32> to vector<1x16x16xf32>
      %115 = vector.shape_cast %114 : vector<1x16x16xf32> to vector<16x16xf32>
      %c0_44 = arith.constant 0 : index
      %c0_45 = arith.constant 0 : index
      %116 = vector.load %arg7[%c0_44, %c0_45] : memref<16x16xf32, #tpu.memory_space<vmem>>, vector<16x16xf32>
      tpu.vector_store %arg7[%c0_44, %c0_45], %115 {strides = array<i32>} : memref<16x16xf32, #tpu.memory_space<vmem>>, vector<16x16xf32>,
      %117 = vector.extract_strided_slice %113 {offsets = [1, 0, 0], sizes = [1, 16, 16], strides = [1, 1, 1]} : vector<2x16x16xf32> to vector<1x16x16xf32>
      %118 = vector.shape_cast %117 : vector<1x16x16xf32> to vector<16x16xf32>
      %119 = arith.mulf %115, %115 : vector<16x16xf32>
      %120 = arith.subf %118, %119 : vector<16x16xf32>
      %c0_46 = arith.constant 0 : index
      %c0_47 = arith.constant 0 : index
      %121 = vector.load %arg8[%c0_46, %c0_47] : memref<16x16xf32, #tpu.memory_space<vmem>>, vector<16x16xf32>
      tpu.vector_store %arg8[%c0_46, %c0_47], %120 {strides = array<i32>} : memref<16x16xf32, #tpu.memory_space<vmem>>, vector<16x16xf32>,
      %cst_48 = arith.constant 0xFF800000 : f32
      %122 = vector.broadcast %cst_48 : f32 to vector<16x16xf32>
      %c0_49 = arith.constant 0 : index
      %c0_50 = arith.constant 0 : index
      %123 = vector.load %arg9[%c0_49, %c0_50] : memref<16x16xf32, #tpu.memory_space<vmem>>, vector<16x16xf32>
      tpu.vector_store %arg9[%c0_49, %c0_50], %122 {strides = array<i32>} : memref<16x16xf32, #tpu.memory_space<vmem>>, vector<16x16xf32>,
      %cst_51 = arith.constant 0.000000e+00 : f32
      %124 = vector.broadcast %cst_51 : f32 to vector<16x16xf32>
      %c0_52 = arith.constant 0 : index
      %c0_53 = arith.constant 0 : index
      %125 = vector.load %arg10[%c0_52, %c0_53] : memref<16x16xf32, #tpu.memory_space<vmem>>, vector<16x16xf32>
      tpu.vector_store %arg10[%c0_52, %c0_53], %124 {strides = array<i32>} : memref<16x16xf32, #tpu.memory_space<vmem>>, vector<16x16xf32>,
    } else {
    }
    %8 = vector.extract_strided_slice %4 {offsets = [0, 0, 0], sizes = [1, 16, 16], strides = [1, 1, 1]} : vector<3x16x16xf32> to vector<1x16x16xf32>
    %9 = vector.shape_cast %8 : vector<1x16x16xf32> to vector<16x16xf32>
    %10 = vector.extract_strided_slice %4 {offsets = [0, 0, 0], sizes = [1, 16, 16], strides = [1, 1, 1]} : vector<3x16x16xf32> to vector<1x16x16xf32>
    %11 = vector.shape_cast %10 : vector<1x16x16xf32> to vector<16x16xf32>
    %12 = vector.extract_strided_slice %4 {offsets = [0, 0, 0], sizes = [1, 16, 16], strides = [1, 1, 1]} : vector<3x16x16xf32> to vector<1x16x16xf32>
    %13 = vector.shape_cast %12 : vector<1x16x16xf32> to vector<16x16xf32>
    %14 = arith.mulf %11, %13 : vector<16x16xf32>
    %15 = vector.extract_strided_slice %2 {offsets = [0, 0, 0], sizes = [1, 16, 16], strides = [1, 1, 1]} : vector<3x16x16xf32> to vector<1x16x16xf32>
    %16 = vector.shape_cast %15 : vector<1x16x16xf32> to vector<16x16xf32>
    %17 = vector.extract_strided_slice %4 {offsets = [0, 0, 0], sizes = [1, 16, 16], strides = [1, 1, 1]} : vector<3x16x16xf32> to vector<1x16x16xf32>
    %18 = vector.shape_cast %17 : vector<1x16x16xf32> to vector<16x16xf32>
    %19 = arith.mulf %16, %18 : vector<16x16xf32>
    %20 = vector.extract_strided_slice %4 {offsets = [1, 0, 0], sizes = [1, 16, 16], strides = [1, 1, 1]} : vector<3x16x16xf32> to vector<1x16x16xf32>
    %21 = vector.shape_cast %20 : vector<1x16x16xf32> to vector<16x16xf32>
    %22 = arith.addf %9, %21 : vector<16x16xf32>
    %23 = arith.mulf %21, %21 : vector<16x16xf32>
    %24 = arith.addf %14, %23 : vector<16x16xf32>
    %25 = vector.extract_strided_slice %2 {offsets = [1, 0, 0], sizes = [1, 16, 16], strides = [1, 1, 1]} : vector<3x16x16xf32> to vector<1x16x16xf32>
    %26 = vector.shape_cast %25 : vector<1x16x16xf32> to vector<16x16xf32>
    %27 = arith.mulf %26, %21 : vector<16x16xf32>
    %28 = arith.addf %19, %27 : vector<16x16xf32>
    %29 = vector.extract_strided_slice %4 {offsets = [2, 0, 0], sizes = [1, 16, 16], strides = [1, 1, 1]} : vector<3x16x16xf32> to vector<1x16x16xf32>
    %30 = vector.shape_cast %29 : vector<1x16x16xf32> to vector<16x16xf32>
    %31 = arith.addf %22, %30 : vector<16x16xf32>
    %32 = arith.mulf %30, %30 : vector<16x16xf32>
    %33 = arith.addf %24, %32 : vector<16x16xf32>
    %34 = vector.extract_strided_slice %2 {offsets = [2, 0, 0], sizes = [1, 16, 16], strides = [1, 1, 1]} : vector<3x16x16xf32> to vector<1x16x16xf32>
    %35 = vector.shape_cast %34 : vector<1x16x16xf32> to vector<16x16xf32>
    %36 = arith.mulf %35, %30 : vector<16x16xf32>
    %37 = arith.addf %28, %36 : vector<16x16xf32>
    %c0_11 = arith.constant 0 : index
    %c0_12 = arith.constant 0 : index
    %38 = vector.load %arg6[%c0_11, %c0_12] : memref<48x16xf32, #tpu.memory_space<vmem>>, vector<16x16xf32>
    tpu.vector_store %arg6[%c0_11, %c0_12], %31 {strides = array<i32>} : memref<48x16xf32, #tpu.memory_space<vmem>>, vector<16x16xf32>,
    %c16 = arith.constant 16 : index
    %c0_13 = arith.constant 0 : index
    %39 = vector.load %arg6[%c16, %c0_13] : memref<48x16xf32, #tpu.memory_space<vmem>>, vector<16x16xf32>
    tpu.vector_store %arg6[%c16, %c0_13], %33 {strides = array<i32>} : memref<48x16xf32, #tpu.memory_space<vmem>>, vector<16x16xf32>,
    %c32 = arith.constant 32 : index
    %c0_14 = arith.constant 0 : index
    %40 = vector.load %arg6[%c32, %c0_14] : memref<48x16xf32, #tpu.memory_space<vmem>>, vector<16x16xf32>
    tpu.vector_store %arg6[%c32, %c0_14], %37 {strides = array<i32>} : memref<48x16xf32, #tpu.memory_space<vmem>>, vector<16x16xf32>,
    %c0_15 = arith.constant 0 : index
    %c0_16 = arith.constant 0 : index
    %41 = vector.load %arg6[%c0_15, %c0_16] : memref<48x16xf32, #tpu.memory_space<vmem>>, vector<48x16xf32>
    %cst = arith.constant dense<0.000000e+00> : vector<48x16xf32>
    %42 = tpu.matmul %41, %1, %cst {dimension_numbers = #tpu.dot_dimension_numbers<[1], [0], [0], [1], [0, 0, 1, 1], [], []>} : vector<48x16xf32>, vector<16x16xf32>, vector<48x16xf32> -> vector<48x16xf32>
    %43 = vector.shape_cast %0 : vector<16x16xf32> to vector<1x16x16xf32>
    %44 = vector.shape_cast %43 : vector<1x16x16xf32> to vector<1x16x16xf32>
    %45 = vector.broadcast %44 : vector<1x16x16xf32> to vector<3x16x16xf32>
    %46 = vector.shape_cast %42 : vector<48x16xf32> to vector<3x16x16xf32>
    "tpu.trace_start"() <{level = 10 : i32, message = "nij,njw->niw"}> : () -> ()
    %cst_17 = arith.constant dense<0.000000e+00> : vector<3x16x16xf32>
    %47 = tpu.matmul %45, %46, %cst_17 {dimension_numbers = #tpu.dot_dimension_numbers<[2], [1], [1], [2], [0, 0, 0, 1, 1, 2], [0], [0]>} : vector<3x16x16xf32>, vector<3x16x16xf32>, vector<3x16x16xf32> -> vector<3x16x16xf32>
    "tpu.trace_stop"() : () -> ()
    %48 = vector.extract_strided_slice %47 {offsets = [0, 0, 0], sizes = [1, 16, 16], strides = [1, 1, 1]} : vector<3x16x16xf32> to vector<1x16x16xf32>
    %49 = vector.shape_cast %48 : vector<1x16x16xf32> to vector<16x16xf32>
    %50 = vector.extract_strided_slice %47 {offsets = [1, 0, 0], sizes = [1, 16, 16], strides = [1, 1, 1]} : vector<3x16x16xf32> to vector<1x16x16xf32>
    %51 = vector.shape_cast %50 : vector<1x16x16xf32> to vector<16x16xf32>
    %52 = arith.mulf %49, %49 : vector<16x16xf32>
    %53 = arith.subf %51, %52 : vector<16x16xf32>
    %c0_18 = arith.constant 0 : index
    %c0_19 = arith.constant 0 : index
    %54 = vector.load %arg7[%c0_18, %c0_19] : memref<16x16xf32, #tpu.memory_space<vmem>>, vector<16x16xf32>
    %55 = vector.extract_strided_slice %47 {offsets = [2, 0, 0], sizes = [1, 16, 16], strides = [1, 1, 1]} : vector<3x16x16xf32> to vector<1x16x16xf32>
    %56 = vector.shape_cast %55 : vector<1x16x16xf32> to vector<16x16xf32>
    %57 = arith.mulf %54, %49 : vector<16x16xf32>
    %58 = arith.subf %56, %57 : vector<16x16xf32>
    %cst_20 = arith.constant 2.000000e+00 : f32
    %59 = vector.broadcast %cst_20 : f32 to vector<16x16xf32>
    %60 = arith.mulf %59, %58 : vector<16x16xf32>
    %cst_21 = arith.constant 8.99999984E-4 : f32
    %61 = vector.broadcast %cst_21 : f32 to vector<16x16xf32>
    %62 = arith.addf %60, %61 : vector<16x16xf32>
    %c0_22 = arith.constant 0 : index
    %c0_23 = arith.constant 0 : index
    %63 = vector.load %arg8[%c0_22, %c0_23] : memref<16x16xf32, #tpu.memory_space<vmem>>, vector<16x16xf32>
    %64 = arith.addf %63, %53 : vector<16x16xf32>
    %cst_24 = arith.constant 8.99999984E-4 : f32
    %65 = vector.broadcast %cst_24 : f32 to vector<16x16xf32>
    %66 = arith.addf %64, %65 : vector<16x16xf32>
    %67 = tpu.reciprocal %66 {approx = true} : vector<16x16xf32> -> vector<16x16xf32>
    %68 = arith.mulf %62, %67 : vector<16x16xf32>
    %c0_25 = arith.constant 0 : index
    %c0_26 = arith.constant 0 : index
    %69 = vector.load %arg9[%c0_25, %c0_26] : memref<16x16xf32, #tpu.memory_space<vmem>>, vector<16x16xf32>
    %70 = arith.cmpf ogt, %53, %69 : vector<16x16xf32>
    %c0_27 = arith.constant 0 : index
    %c0_28 = arith.constant 0 : index
    %71 = vector.load %arg10[%c0_27, %c0_28] : memref<16x16xf32, #tpu.memory_space<vmem>>, vector<16x16xf32>
    %72 = arith.select %70, %68, %71 : vector<16x16xi1>, vector<16x16xf32>
    %c0_29 = arith.constant 0 : index
    %c0_30 = arith.constant 0 : index
    %73 = vector.load %arg10[%c0_29, %c0_30] : memref<16x16xf32, #tpu.memory_space<vmem>>, vector<16x16xf32>
    tpu.vector_store %arg10[%c0_29, %c0_30], %72 {strides = array<i32>} : memref<16x16xf32, #tpu.memory_space<vmem>>, vector<16x16xf32>,
    %c0_31 = arith.constant 0 : index
    %c0_32 = arith.constant 0 : index
    %74 = vector.load %arg9[%c0_31, %c0_32] : memref<16x16xf32, #tpu.memory_space<vmem>>, vector<16x16xf32>
    %75 = arith.select %70, %53, %74 : vector<16x16xi1>, vector<16x16xf32>
    %c0_33 = arith.constant 0 : index
    %c0_34 = arith.constant 0 : index
    %76 = vector.load %arg9[%c0_33, %c0_34] : memref<16x16xf32, #tpu.memory_space<vmem>>, vector<16x16xf32>
    tpu.vector_store %arg9[%c0_33, %c0_34], %75 {strides = array<i32>} : memref<16x16xf32, #tpu.memory_space<vmem>>, vector<16x16xf32>,
    %c2_i32 = arith.constant 2 : i32
    %77 = arith.cmpi eq, %arg0, %c2_i32 : i32
    %78 = arith.extui %77 : i1 to i32
    %c0_i32_35 = arith.constant 0 : i32
    %79 = arith.cmpi ne, %78, %c0_i32_35 : i32
    scf.if %79 {
      %c0_36 = arith.constant 0 : index
      %c0_37 = arith.constant 0 : index
      %80 = vector.load %arg10[%c0_36, %c0_37] : memref<16x16xf32, #tpu.memory_space<vmem>>, vector<16x16xf32>
      %81 = vector.shape_cast %80 : vector<16x16xf32> to vector<1x16x16xf32>
      %cst_38 = arith.constant dense<0.000000e+00> : vector<1xf32>
      %82 = vector.multi_reduction <add>, %81, %cst_38 [1, 2] : vector<1x16x16xf32> to vector<1xf32>
      %83 = vector.shape_cast %82 : vector<1xf32> to vector<1x1x1xf32>
      %84 = vector.extract %83[0, 0, 0] : f32 from vector<1x1x1xf32>
      %cst_39 = arith.constant 3.906250e-03 : f32
      %85 = arith.mulf %84, %cst_39 : f32
      %86 = vector.broadcast %85 : f32 to vector<1x1xf32>
      %c0_40 = arith.constant 0 : index
      %c0_41 = arith.constant 0 : index
      %87 = vector.load %arg5[%c0_40, %c0_41] : memref<1x1xf32, #tpu.memory_space<vmem>>, vector<1x1xf32>
      tpu.vector_store %arg5[%c0_40, %c0_41], %86 {strides = array<i32>} : memref<1x1xf32, #tpu.memory_space<vmem>>, vector<1x1xf32>,
    } else {
    }
    return
  }
  func.func @transform_0(%arg0: i32) -> (i32, i32, i32) {
    %c0_i32 = arith.constant 0 : i32
    %c0_i32_0 = arith.constant 0 : i32
    %c0_i32_1 = arith.constant 0 : i32
    %c0_i32_2 = arith.constant 0 : i32
    return %c0_i32, %c0_i32_0, %c0_i32_1 : i32, i32, i32
  }
  func.func @transform_1(%arg0: i32) -> (i32, i32, i32, i32) {
    %c0_i32 = arith.constant 0 : i32
    %c0_i32_0 = arith.constant 0 : i32
    %c0_i32_1 = arith.constant 0 : i32
    %c0_i32_2 = arith.constant 0 : i32
    return %arg0, %c0_i32, %c0_i32_0, %c0_i32_1 : i32, i32, i32, i32
  }
  func.func @transform_2(%arg0: i32) -> (i32, i32) {
    %c0_i32 = arith.constant 0 : i32
    %c0_i32_0 = arith.constant 0 : i32
    %c0_i32_1 = arith.constant 0 : i32
    return %c0_i32, %c0_i32_0 : i32, i32
  }
  func.func @transform_3(%arg0: i32) -> (i32, i32) {
    %c0_i32 = arith.constant 0 : i32
    %c0_i32_0 = arith.constant 0 : i32
    %c0_i32_1 = arith.constant 0 : i32
    return %c0_i32, %c0_i32_0 : i32, i32
  }
  func.func @transform_4(%arg0: i32) -> (i32, i32) {
    %c0_i32 = arith.constant 0 : i32
    %c0_i32_0 = arith.constant 0 : i32
    %c0_i32_1 = arith.constant 0 : i32
    return %c0_i32, %c0_i32_0 : i32, i32
  }
}

</mosaic_0001>

<llo_original>
// kernel: tpu_custom_call.1
$region0: #{tpu_custom_call.1}
  #allocation0 [shape = 'u32[]', space=smem, size = 0x4, offset = 0x4, fixed_abs, tag = 'smem constant byte address 0x4 - core index']
  #allocation1 [shape = 'u32[72,128]{1,0:T(1,128)}', space=vmem, size = 0x9000, scoped, tag = 'internal scratch']
  #allocation2 [shape = 'f32[48,16]{1,0:T(8,128)}', space=vmem, size = 0x6000, scoped, tag = 'scratch operand']
  #allocation3 [shape = 'f32[16,16]{1,0:T(8,128)}', space=vmem, size = 0x2000, scoped, tag = 'scratch operand']
  #allocation4 [shape = 'f32[16,16]{1,0:T(8,128)}', space=vmem, size = 0x2000, scoped, tag = 'scratch operand']
  #allocation5 [shape = 'f32[16,16]{1,0:T(8,128)}', space=vmem, size = 0x2000, scoped, tag = 'scratch operand']
  #allocation6 [shape = 'f32[16,16]{1,0:T(8,128)}', space=vmem, size = 0x2000, scoped, tag = 'scratch operand']
  %s0 = inlined_call_operand.hbm [shape: f32[3,16,16], index: 0, kind: input, shape index: {}]
  %s1 = inlined_call_operand.hbm [shape: f32[3,3,16,16], index: 1, kind: input, shape index: {}]
  %s2 = inlined_call_operand.hbm [shape: f32[16,16], index: 2, kind: input, shape index: {}]
  %s3 = inlined_call_operand.hbm [shape: f32[16,16], index: 3, kind: input, shape index: {}]
  %s4 = inlined_call_operand.hbm [shape: f32[1,1], index: 4, kind: output, shape index: {}]
  %s5 = sld [smem:[#allocation0]]
  $region73: #{tpu_custom_call.1} parent=0
    _
  %s7 = ssub.s32 1, %s5
  %s8 = scalar_select 0, %s7, %s5
  $region1: #{tpu_custom_call.1} parent=0
    #allocation7 [shape = 'u8[24576]{0}', space=vmem, size = 0x6000, scoped, tag = 'input window, operand 0, single buffered']
    #allocation8 [shape = 's32[2]{0}', space=sflag, size = 0x8, scoped, tag = 'scoped memory for tpu_custom_call.1']
    #allocation9 [shape = 's32[2]{0}', space=sflag, size = 0x8, scoped, tag = 'scoped memory for tpu_custom_call.1']
    #allocation10 [shape = 'u8[49152]{0}', space=vmem, size = 0xc000, scoped, tag = 'input window, operand 1']
    #allocation11 [shape = 's32[2]{0}', space=sflag, size = 0x8, scoped, tag = 'scoped memory for tpu_custom_call.1']
    #allocation12 [shape = 'u8[8192]{0}', space=vmem, size = 0x2000, scoped, tag = 'input window, operand 2, single buffered']
    #allocation13 [shape = 'u8[8192]{0}', space=vmem, size = 0x2000, scoped, tag = 'input window, operand 3, single buffered']
    #allocation14 [shape = 's32[1]{0}', space=sflag, size = 0x4, scoped, tag = 'scoped memory for tpu_custom_call.1']
    #allocation15 [shape = 'u8[512]{0}', space=vmem, size = 0x400, scoped, tag = 'output window, operand 0, single buffered']
    %9 = vsyncpa [#allocation8], 0
    %10 = vsyncpa [#allocation11], 0
    %s11 = scalar_lea.sflag [#allocation11], 1
    %12 = vsyncpa %s11, 0
    %13 = vsyncpa [#allocation14], 0
    %14 = vsyncpa [#allocation9], 0
    loop: start=0, step=1, limit=5
    $region2: #{tpu_custom_call.1} parent=1 // loop_pre_header
      _
    $region3: #{tpu_custom_call.1} parent=1 // loop_header
      %s16 = sphi 0, %s20
      %p17 = scmp.ge.s32.totalorder %s16, 5
      %s24 = sphi 0, %s24
      %s26 = sphi 0, %s24
      %s27 = sphi 0, %s26
      %s41 = sphi 0, %s27
      %s47 = sphi 0, %s49
      %s50 = sphi 0, %s47
      %s51 = sphi 0, %s50
      %s67 = sphi 0, %s51
      %s71 = sphi 0, %s71
      %s73 = sphi 0, %s71
      %s74 = sphi 0, %s73
      %s88 = sphi 0, %s74
      %s92 = sphi 0, %s92
      %s94 = sphi 0, %s92
      %s95 = sphi 0, %s94
      %s109 = sphi 0, %s95
      %s113 = sphi 0, %s113
      %s115 = sphi 0, %s113
      %s116 = sphi 0, %s115
      %s130 = sphi 0, %s116
    $region4: #{tpu_custom_call.1} parent=1 // loop_header_branch
      %19 = sbr.rel (%p17) target = $region8
    $region5: #{tpu_custom_call.1} parent=1 // loop_body
      %s21 = ssub.s32 %s16, 1
      %s22 = ssub.s32 %s16, 2
      %s23 = sadd.s32 %s16, 1
      %s25 = sadd.s32 %s24, 1
      %p28 = scmp.eq.s32.totalorder %s16, 2
      %p29 = scmp.ne.s32.totalorder %s24, %s26
      %p30 = scmp.eq.s32.totalorder %s16, 0
      %p31 = por %p29, %p30
      %p32 = scmp.ne.s32.totalorder %s24, %s26
      %p33 = scmp.eq.s32.totalorder %s21, 2
      %p34 = por %p32, %p33
      %p35 = scmp.ne.s32.totalorder %s26, %s27
      %p36 = scmp.eq.s32.totalorder %s21, 0
      %p37 = por %p35, %p36
      %p38 = scmp.ne.s32.totalorder %s26, %s27
      %p39 = scmp.eq.s32.totalorder %s22, 2
      %p40 = por %p38, %p39
      %p42 = scmp.ne.s32.totalorder %s27, %s41
      %p43 = scmp.eq.s32.totalorder %s22, 0
      %p44 = por %p42, %p43
      %s45 = ssub.s32 %s16, %s23
      %p46 = scmp.eq.s32.totalorder %s45, 0
      %s48 = sadd.s32 %s47, 1
      %s49 = scalar_select %p46, %s47, %s48
      %p52 = pneg %p46
      %p53 = scmp.eq.s32.totalorder %s16, 2
      %p54 = por %p52, %p53
      %p55 = scmp.ne.s32.totalorder %s47, %s50
      %p56 = scmp.eq.s32.totalorder %s16, 0
      %p57 = por %p55, %p56
      %p58 = scmp.ne.s32.totalorder %s47, %s50
      %p59 = scmp.eq.s32.totalorder %s21, 2
      %p60 = por %p58, %p59
      %p61 = scmp.ne.s32.totalorder %s50, %s51
      %p62 = scmp.eq.s32.totalorder %s21, 0
      %p63 = por %p61, %p62
      %p64 = scmp.ne.s32.totalorder %s50, %s51
      %p65 = scmp.eq.s32.totalorder %s22, 2
      %p66 = por %p64, %p65
      %p68 = scmp.ne.s32.totalorder %s51, %s67
      %p69 = scmp.eq.s32.totalorder %s22, 0
      %p70 = por %p68, %p69
      %s72 = sadd.s32 %s71, 1
      %p75 = scmp.eq.s32.totalorder %s16, 2
      %p76 = scmp.ne.s32.totalorder %s71, %s73
      %p77 = scmp.eq.s32.totalorder %s16, 0
      %p78 = por %p76, %p77
      %p79 = scmp.ne.s32.totalorder %s71, %s73
      %p80 = scmp.eq.s32.totalorder %s21, 2
      %p81 = por %p79, %p80
      %p82 = scmp.ne.s32.totalorder %s73, %s74
      %p83 = scmp.eq.s32.totalorder %s21, 0
      %p84 = por %p82, %p83
      %p85 = scmp.ne.s32.totalorder %s73, %s74
      %p86 = scmp.eq.s32.totalorder %s22, 2
      %p87 = por %p85, %p86
      %p89 = scmp.ne.s32.totalorder %s74, %s88
      %p90 = scmp.eq.s32.totalorder %s22, 0
      %p91 = por %p89, %p90
      %s93 = sadd.s32 %s92, 1
      %p96 = scmp.eq.s32.totalorder %s16, 2
      %p97 = scmp.ne.s32.totalorder %s92, %s94
      %p98 = scmp.eq.s32.totalorder %s16, 0
      %p99 = por %p97, %p98
      %p100 = scmp.ne.s32.totalorder %s92, %s94
      %p101 = scmp.eq.s32.totalorder %s21, 2
      %p102 = por %p100, %p101
      %p103 = scmp.ne.s32.totalorder %s94, %s95
      %p104 = scmp.eq.s32.totalorder %s21, 0
      %p105 = por %p103, %p104
      %p106 = scmp.ne.s32.totalorder %s94, %s95
      %p107 = scmp.eq.s32.totalorder %s22, 2
      %p108 = por %p106, %p107
      %p110 = scmp.ne.s32.totalorder %s95, %s109
      %p111 = scmp.eq.s32.totalorder %s22, 0
      %p112 = por %p110, %p111
      %s114 = sadd.s32 %s113, 1
      %p117 = scmp.eq.s32.totalorder %s16, 2
      %p118 = scmp.ne.s32.totalorder %s113, %s115
      %p119 = scmp.eq.s32.totalorder %s16, 0
      %p120 = por %p118, %p119
      %p121 = scmp.ne.s32.totalorder %s113, %s115
      %p122 = scmp.eq.s32.totalorder %s21, 2
      %p123 = por %p121, %p122
      %p124 = scmp.ne.s32.totalorder %s115, %s116
      %p125 = scmp.eq.s32.totalorder %s21, 0
      %p126 = por %p124, %p125
      %p127 = scmp.ne.s32.totalorder %s115, %s116
      %p128 = scmp.eq.s32.totalorder %s22, 2
      %p129 = por %p127, %p128
      %p131 = scmp.ne.s32.totalorder %s116, %s130
      %p132 = scmp.eq.s32.totalorder %s22, 0
      %p133 = por %p131, %p132
      %p134 = scmp.le.s32.totalorder 1, %s16
      %p135 = scmp.lt.s32.totalorder %s16, 4
      %p136 = pnand %p134, %p135
      %p137 = pneg %p136
      // Predicated region
      $region9: #{tpu_custom_call.1} parent=5 // pred_check
        _
      $region10: #{tpu_custom_call.1} parent=5 // pred_check_branch
        %139 = sbr.rel (%p136) target = $region12
      $region11: #{tpu_custom_call.1} parent=5 // pred_region
        %s140 = ssub.s32 %s16, 1
        // Predicated region
        $region13: #{tpu_custom_call.1} parent=11 // pred_check
          %p141 = pneg %p37
        $region14: #{tpu_custom_call.1} parent=11 // pred_check_branch
          %143 = sbr.rel (%p141) target = $region16
        $region15: #{tpu_custom_call.1} parent=11 // pred_region
          %145 = vsyncadd [#allocation8], 0
          %s146 = sshll.u32 %s0, 4
          %s147 = int_to_ptr.hbm [resolvable:$true] %s146
          %s148 = sshll.u32 [#allocation7], 4
          %s149 = int_to_ptr.vmem [resolvable:$true] %s148
          %154 = dma.hbm_to_vmem [thread:$0]  %s147, 768, %s149, [#allocation8], 128, 128, 8
        $region16: #{tpu_custom_call.1} parent=11 // pred_fallthru
          _
        // Predicated region
        $region17: #{tpu_custom_call.1} parent=11 // pred_check
          %p155 = pneg %p84
        $region18: #{tpu_custom_call.1} parent=11 // pred_check_branch
          %157 = sbr.rel (%p155) target = $region20
        $region19: #{tpu_custom_call.1} parent=11 // pred_region
          %159 = vsyncadd [#allocation11], 0
          %s160 = sshll.u32 %s2, 4
          %s161 = int_to_ptr.hbm [resolvable:$true] %s160
          %s162 = sshll.u32 [#allocation12], 4
          %s163 = int_to_ptr.vmem [resolvable:$true] %s162
          %168 = dma.hbm_to_vmem [thread:$0]  %s161, 256, %s163, [#allocation11], 128, 128, 8
        $region20: #{tpu_custom_call.1} parent=11 // pred_fallthru
          _
        // Predicated region
        $region21: #{tpu_custom_call.1} parent=11 // pred_check
          %p169 = pneg %p105
        $region22: #{tpu_custom_call.1} parent=11 // pred_check_branch
          %171 = sbr.rel (%p169) target = $region24
        $region23: #{tpu_custom_call.1} parent=11 // pred_region
          %173 = vsyncadd [#allocation14], 0
          %s174 = sshll.u32 %s3, 4
          %s175 = int_to_ptr.hbm [resolvable:$true] %s174
          %s176 = sshll.u32 [#allocation13], 4
          %s177 = int_to_ptr.vmem [resolvable:$true] %s176
          %182 = dma.hbm_to_vmem [thread:$0]  %s175, 256, %s177, [#allocation14], 128, 128, 8
        $region24: #{tpu_custom_call.1} parent=11 // pred_fallthru
          _
      $region12: #{tpu_custom_call.1} parent=5 // pred_fallthru
        _
      %p183 = scmp.lt.s32.totalorder %s16, 3
      // Predicated region
      $region25: #{tpu_custom_call.1} parent=5 // pred_check
        %p184 = pneg %p183
      $region26: #{tpu_custom_call.1} parent=5 // pred_check_branch
        %186 = sbr.rel (%p184) target = $region28
      $region27: #{tpu_custom_call.1} parent=5 // pred_region
        // Predicated region
        $region29: #{tpu_custom_call.1} parent=27 // pred_check
          %p187 = pneg %p57
        $region30: #{tpu_custom_call.1} parent=27 // pred_check_branch
          %189 = sbr.rel (%p187) target = $region32
        $region31: #{tpu_custom_call.1} parent=27 // pred_region
          %s190 = sand.u32 %s16, 1
          %s191 = scalar_lea.sflag [#allocation11], %s190
          %s192 = sand.u32 %s47, 1
          %s193 = smul.addr %s192, 48
          %s194 = scalar_lea.vmem [#allocation10], %s193
          %196 = vsyncadd %s191, 0
          %s197 = smul.addr %s16, 6
          %s198 = smul.addr %s197, 8
          %s199 = scalar_lea.hbm %s1, %s198
          %s200 = sshll.u32 %s199, 4
          %s201 = int_to_ptr.hbm [resolvable:$true] %s200
          %s202 = sshll.u32 %s194, 4
          %s203 = int_to_ptr.vmem [resolvable:$true] %s202
          %208 = dma.hbm_to_vmem [thread:$0]  %s201, 768, %s203, %s191, 128, 128, 8
        $region32: #{tpu_custom_call.1} parent=27 // pred_fallthru
          _
      $region28: #{tpu_custom_call.1} parent=5 // pred_fallthru
        _
      %p209 = scmp.le.s32.totalorder 1, %s16
      %p210 = scmp.lt.s32.totalorder %s16, 4
      %p211 = pnand %p209, %p210
      %p212 = pneg %p211
      // Predicated region
      $region33: #{tpu_custom_call.1} parent=5 // pred_check
        _
      $region34: #{tpu_custom_call.1} parent=5 // pred_check_branch
        %214 = sbr.rel (%p211) target = $region36
      $region35: #{tpu_custom_call.1} parent=5 // pred_region
        %s215 = ssub.s32 %s16, 1
        // Predicated region
        $region37: #{tpu_custom_call.1} parent=35 // pred_check
          %p216 = pneg %p37
        $region38: #{tpu_custom_call.1} parent=35 // pred_check_branch
          %218 = sbr.rel (%p216) target = $region40
        $region39: #{tpu_custom_call.1} parent=35 // pred_region
          %220 = dma.done [#allocation8], 768
        $region40: #{tpu_custom_call.1} parent=35 // pred_fallthru
          _
        %s221 = sand.u32 %s21, 1
        %s222 = scalar_lea.sflag [#allocation11], %s221
        %s223 = sand.u32 %s50, 1
        %s224 = smul.addr %s223, 48
        %s225 = scalar_lea.vmem [#allocation10], %s224
        // Predicated region
        $region41: #{tpu_custom_call.1} parent=35 // pred_check
          %p226 = pneg %p63
        $region42: #{tpu_custom_call.1} parent=35 // pred_check_branch
          %228 = sbr.rel (%p226) target = $region44
        $region43: #{tpu_custom_call.1} parent=35 // pred_region
          %230 = dma.done %s222, 768
        $region44: #{tpu_custom_call.1} parent=35 // pred_fallthru
          _
        // Predicated region
        $region45: #{tpu_custom_call.1} parent=35 // pred_check
          %p231 = pneg %p84
        $region46: #{tpu_custom_call.1} parent=35 // pred_check_branch
          %233 = sbr.rel (%p231) target = $region48
        $region47: #{tpu_custom_call.1} parent=35 // pred_region
          %235 = dma.done [#allocation11], 256
        $region48: #{tpu_custom_call.1} parent=35 // pred_fallthru
          _
        // Predicated region
        $region49: #{tpu_custom_call.1} parent=35 // pred_check
          %p236 = pneg %p105
        $region50: #{tpu_custom_call.1} parent=35 // pred_check_branch
          %238 = sbr.rel (%p236) target = $region52
        $region51: #{tpu_custom_call.1} parent=35 // pred_region
          %240 = dma.done [#allocation14], 256
        $region52: #{tpu_custom_call.1} parent=35 // pred_fallthru
          _
        %p241 = pneg %p37
        %p242 = pneg %p34
        %s243 = sand.u32 %s21, 1
        %s244 = scalar_lea.sflag [#allocation11], %s243
        %s245 = sand.u32 %s50, 1
        %s246 = smul.addr %s245, 48
        %s247 = scalar_lea.vmem [#allocation10], %s246
        %p248 = pneg %p63
        %p249 = pneg %p60
        %p250 = pneg %p84
        %p251 = pneg %p81
        %p252 = pneg %p105
        %p253 = pneg %p102
        %p254 = pneg %p126
        %p255 = pneg %p123
        %v256 = vld [vmem:[#allocation12] sm:$0xff]
        %v257 = vld [vmem:[#allocation12 + $0x8] sm:$0xff]
        %v258 = vld [vmem:[#allocation13] sm:$0xff]
        %v259 = vld [vmem:[#allocation13 + $0x8] sm:$0xff]
        %v260 = vld [vmem:[#allocation7] sm:$0xff]
        %v261 = vld [vmem:[#allocation7 + $0x8] sm:$0xff]
        %v262 = vld [vmem:[#allocation7 + $0x10] sm:$0xff]
        %v263 = vld [vmem:[#allocation7 + $0x18] sm:$0xff]
        %v264 = vld [vmem:[#allocation7 + $0x20] sm:$0xff]
        %v265 = vld [vmem:[#allocation7 + $0x28] sm:$0xff]
        %v266 = vld [vmem:[%s225] sm:$0xff]
        %v267 = vld [vmem:[%s225 + $0x8] sm:$0xff]
        %v268 = vld [vmem:[%s225 + $0x10] sm:$0xff]
        %v269 = vld [vmem:[%s225 + $0x18] sm:$0xff]
        %v270 = vld [vmem:[%s225 + $0x20] sm:$0xff]
        %v271 = vld [vmem:[%s225 + $0x28] sm:$0xff]
        %p272 = scmp.eq.s32.totalorder %s21, 0
        // Predicated region
        $region53: #{tpu_custom_call.1} parent=35 // pred_check
          %p273 = pneg %p272
        $region54: #{tpu_custom_call.1} parent=35 // pred_check_branch
          %275 = sbr.rel (%p273) target = $region56
        $region55: #{tpu_custom_call.1} parent=35 // pred_region
          %v276 = vmul.f32 %v260, %v260
          %v277 = vmul.f32 %v261, %v261
          %v278 = vadd.f32 %v260, %v262
          %v279 = vadd.f32 %v261, %v263
          %v280 = vmul.f32 %v262, %v262
          %v281 = vmul.f32 %v263, %v263
          %v282 = vadd.f32 %v276, %v280
          %v283 = vadd.f32 %v277, %v281
          %v284 = vadd.f32 %v278, %v264
          %v285 = vadd.f32 %v279, %v265
          %v286 = vmul.f32 %v264, %v264
          %v287 = vmul.f32 %v265, %v265
          %v288 = vadd.f32 %v282, %v286
          %v289 = vadd.f32 %v283, %v287
          %vm290 = vcmask 130048
          %291 = vst.msk [vmem:[#allocation2] sm:$0xff] %vm290, %v284
          %292 = vst.msk [vmem:[#allocation2 + $0x8] sm:$0xff] %vm290, %v285
          %293 = vst.msk [vmem:[#allocation2 + $0x10] sm:$0xff] %vm290, %v288
          %294 = vst.msk [vmem:[#allocation2 + $0x18] sm:$0xff] %vm290, %v289
          %v295 = vld [vmem:[#allocation2] sm:$0xff]
          %v296 = vld [vmem:[#allocation2 + $0x8] sm:$0xff]
          %v297 = vld [vmem:[#allocation2 + $0x10] sm:$0xff]
          %v298 = vld [vmem:[#allocation2 + $0x18] sm:$0xff]
          %v300 = vsel %vm290, %v295, 0
          %v303 = vsel %vm290, %v296, 0
          %v306 = vsel %vm290, %v297, 0
          %v309 = vsel %vm290, %v298, 0
          %311 = vmatpush.msra.mxu0 0.0
          %312 = vmatpush.msra.mxu0 0.0
          %313 = vmatpush.msra.mxu0 0.0
          %314 = vmatpush.msra.mxu0 0.0
          %315 = vmatpush.msra.mxu0 0.0
          %316 = vmatpush.msra.mxu0 0.0
          %317 = vmatpush.msra.mxu0 0.0
          %318 = vmatpush.msra.mxu0 0.0
          %319 = vmatpush.msra.mxu0 0.0
          %320 = vmatpush.msra.mxu0 0.0
          %321 = vmatpush.msra.mxu0 0.0
          %322 = vmatpush.msra.mxu0 0.0
          %323 = vmatpush.msra.mxu0 0.0
          %324 = vmatpush.msra.mxu0 0.0
          %325 = vmatpush.msra.mxu0 %v259
          %326 = vmatpush.msra.mxu0 %v258
          %327 = vmatmul.f32.gmra.mxu0 %v300
          %v328 = vpop.f32.mrf.mxu0
          %v329 = vadd.f32 0.0, %v328
          %330 = vmatmul.f32.gmra.mxu0 %v303
          %v331 = vpop.f32.mrf.mxu0
          %v332 = vadd.f32 0.0, %v331
          %333 = vmatmul.f32.gmra.mxu0 %v306
          %v334 = vpop.f32.mrf.mxu0
          %v335 = vadd.f32 0.0, %v334
          %336 = vmatmul.f32.gmra.mxu0 %v309
          %v337 = vpop.f32.mrf.mxu0
          %v338 = vadd.f32 0.0, %v337
          %339 = vdwg.mxu0
          %v341 = vsel %vm290, %v256, 0
          %v344 = vsel %vm290, %v257, 0
          %346 = vmatpush.msra.mxu0 0.0
          %347 = vmatpush.msra.mxu0 0.0
          %348 = vmatpush.msra.mxu0 0.0
          %349 = vmatpush.msra.mxu0 0.0
          %350 = vmatpush.msra.mxu0 0.0
          %351 = vmatpush.msra.mxu0 0.0
          %352 = vmatpush.msra.mxu0 0.0
          %353 = vmatpush.msra.mxu0 0.0
          %354 = vmatpush.msra.mxu0 0.0
          %355 = vmatpush.msra.mxu0 0.0
          %356 = vmatpush.msra.mxu0 0.0
          %357 = vmatpush.msra.mxu0 0.0
          %358 = vmatpush.msra.mxu0 0.0
          %359 = vmatpush.msra.mxu0 0.0
          %360 = vmatpush.msra.mxu0 %v332
          %361 = vmatpush.msra.mxu0 %v329
          %362 = vmatmul.f32.gmra.mxu0 %v341
          %v363 = vpop.f32.mrf.mxu0
          %v364 = vadd.f32 0.0, %v363
          %365 = vmatmul.f32.gmra.mxu0 %v344
          %v366 = vpop.f32.mrf.mxu0
          %v367 = vadd.f32 0.0, %v366
          %368 = vdwg.mxu0
          %369 = vmatpush.msra.mxu0 0.0
          %370 = vmatpush.msra.mxu0 0.0
          %371 = vmatpush.msra.mxu0 0.0
          %372 = vmatpush.msra.mxu0 0.0
          %373 = vmatpush.msra.mxu0 0.0
          %374 = vmatpush.msra.mxu0 0.0
          %375 = vmatpush.msra.mxu0 0.0
          %376 = vmatpush.msra.mxu0 0.0
          %377 = vmatpush.msra.mxu0 0.0
          %378 = vmatpush.msra.mxu0 0.0
          %379 = vmatpush.msra.mxu0 0.0
          %380 = vmatpush.msra.mxu0 0.0
          %381 = vmatpush.msra.mxu0 0.0
          %382 = vmatpush.msra.mxu0 0.0
          %383 = vmatpush.msra.mxu0 %v338
          %384 = vmatpush.msra.mxu0 %v335
          %385 = vmatmul.f32.gmra.mxu0 %v341
          %v386 = vpop.f32.mrf.mxu0
          %v387 = vadd.f32 0.0, %v386
          %388 = vmatmul.f32.gmra.mxu0 %v344
          %v389 = vpop.f32.mrf.mxu0
          %v390 = vadd.f32 0.0, %v389
          %391 = vdwg.mxu0
          %392 = vst.msk [vmem:[#allocation3] sm:$0xff] %vm290, %v364
          %393 = vst.msk [vmem:[#allocation3 + $0x8] sm:$0xff] %vm290, %v367
          %v394 = vmul.f32 %v364, %v364
          %v395 = vmul.f32 %v367, %v367
          %v396 = vsub.f32 %v387, %v394
          %v397 = vsub.f32 %v390, %v395
          %398 = vst.msk [vmem:[#allocation4] sm:$0xff] %vm290, %v396
          %399 = vst.msk [vmem:[#allocation4 + $0x8] sm:$0xff] %vm290, %v397
          %400 = vst.msk [vmem:[#allocation5] sm:$0xff] %vm290, -inf
          %401 = vst.msk [vmem:[#allocation5 + $0x8] sm:$0xff] %vm290, -inf
          %402 = vst.msk [vmem:[#allocation6] sm:$0xff] %vm290, 0.0
          %403 = vst.msk [vmem:[#allocation6 + $0x8] sm:$0xff] %vm290, 0.0
        $region56: #{tpu_custom_call.1} parent=35 // pred_fallthru
          _
        %v404 = vmul.f32 %v266, %v266
        %v405 = vmul.f32 %v267, %v267
        %v406 = vmul.f32 %v260, %v266
        %v407 = vmul.f32 %v261, %v267
        %v408 = vadd.f32 %v266, %v268
        %v409 = vadd.f32 %v267, %v269
        %v410 = vmul.f32 %v268, %v268
        %v411 = vmul.f32 %v269, %v269
        %v412 = vadd.f32 %v404, %v410
        %v413 = vadd.f32 %v405, %v411
        %v414 = vmul.f32 %v262, %v268
        %v415 = vmul.f32 %v263, %v269
        %v416 = vadd.f32 %v406, %v414
        %v417 = vadd.f32 %v407, %v415
        %v418 = vadd.f32 %v408, %v270
        %v419 = vadd.f32 %v409, %v271
        %v420 = vmul.f32 %v270, %v270
        %v421 = vmul.f32 %v271, %v271
        %v422 = vadd.f32 %v412, %v420
        %v423 = vadd.f32 %v413, %v421
        %v424 = vmul.f32 %v264, %v270
        %v425 = vmul.f32 %v265, %v271
        %v426 = vadd.f32 %v416, %v424
        %v427 = vadd.f32 %v417, %v425
        %vm428 = vcmask 130048
        %429 = vst.msk [vmem:[#allocation2] sm:$0xff] %vm428, %v418
        %430 = vst.msk [vmem:[#allocation2 + $0x8] sm:$0xff] %vm428, %v419
        %431 = vst.msk [vmem:[#allocation2 + $0x10] sm:$0xff] %vm428, %v422
        %432 = vst.msk [vmem:[#allocation2 + $0x18] sm:$0xff] %vm428, %v423
        %433 = vst.msk [vmem:[#allocation2 + $0x20] sm:$0xff] %vm428, %v426
        %434 = vst.msk [vmem:[#allocation2 + $0x28] sm:$0xff] %vm428, %v427
        %v435 = vld [vmem:[#allocation2] sm:$0xff]
        %v436 = vld [vmem:[#allocation2 + $0x8] sm:$0xff]
        %v437 = vld [vmem:[#allocation2 + $0x10] sm:$0xff]
        %v438 = vld [vmem:[#allocation2 + $0x18] sm:$0xff]
        %v439 = vld [vmem:[#allocation2 + $0x20] sm:$0xff]
        %v440 = vld [vmem:[#allocation2 + $0x28] sm:$0xff]
        %v442 = vsel %vm428, %v435, 0
        %v445 = vsel %vm428, %v436, 0
        %v448 = vsel %vm428, %v437, 0
        %v451 = vsel %vm428, %v438, 0
        %v454 = vsel %vm428, %v439, 0
        %v457 = vsel %vm428, %v440, 0
        %459 = vmatpush.msra.mxu0 0.0
        %460 = vmatpush.msra.mxu0 0.0
        %461 = vmatpush.msra.mxu0 0.0
        %462 = vmatpush.msra.mxu0 0.0
        %463 = vmatpush.msra.mxu0 0.0
        %464 = vmatpush.msra.mxu0 0.0
        %465 = vmatpush.msra.mxu0 0.0
        %466 = vmatpush.msra.mxu0 0.0
        %467 = vmatpush.msra.mxu0 0.0
        %468 = vmatpush.msra.mxu0 0.0
        %469 = vmatpush.msra.mxu0 0.0
        %470 = vmatpush.msra.mxu0 0.0
        %471 = vmatpush.msra.mxu0 0.0
        %472 = vmatpush.msra.mxu0 0.0
        %473 = vmatpush.msra.mxu0 %v259
        %474 = vmatpush.msra.mxu0 %v258
        %475 = vmatmul.f32.gmra.mxu0 %v442
        %v476 = vpop.f32.mrf.mxu0
        %v477 = vadd.f32 0.0, %v476
        %478 = vmatmul.f32.gmra.mxu0 %v445
        %v479 = vpop.f32.mrf.mxu0
        %v480 = vadd.f32 0.0, %v479
        %481 = vmatmul.f32.gmra.mxu0 %v448
        %v482 = vpop.f32.mrf.mxu0
        %v483 = vadd.f32 0.0, %v482
        %484 = vmatmul.f32.gmra.mxu0 %v451
        %v485 = vpop.f32.mrf.mxu0
        %v486 = vadd.f32 0.0, %v485
        %487 = vmatmul.f32.gmra.mxu0 %v454
        %v488 = vpop.f32.mrf.mxu0
        %v489 = vadd.f32 0.0, %v488
        %490 = vmatmul.f32.gmra.mxu0 %v457
        %v491 = vpop.f32.mrf.mxu0
        %v492 = vadd.f32 0.0, %v491
        %493 = vdwg.mxu0
        %v495 = vsel %vm428, %v256, 0
        %v498 = vsel %vm428, %v257, 0
        %500 = vmatpush.msra.mxu0 0.0
        %501 = vmatpush.msra.mxu0 0.0
        %502 = vmatpush.msra.mxu0 0.0
        %503 = vmatpush.msra.mxu0 0.0
        %504 = vmatpush.msra.mxu0 0.0
        %505 = vmatpush.msra.mxu0 0.0
        %506 = vmatpush.msra.mxu0 0.0
        %507 = vmatpush.msra.mxu0 0.0
        %508 = vmatpush.msra.mxu0 0.0
        %509 = vmatpush.msra.mxu0 0.0
        %510 = vmatpush.msra.mxu0 0.0
        %511 = vmatpush.msra.mxu0 0.0
        %512 = vmatpush.msra.mxu0 0.0
        %513 = vmatpush.msra.mxu0 0.0
        %514 = vmatpush.msra.mxu0 %v480
        %515 = vmatpush.msra.mxu0 %v477
        %516 = vmatmul.f32.gmra.mxu0 %v495
        %v517 = vpop.f32.mrf.mxu0
        %v518 = vadd.f32 0.0, %v517
        %519 = vmatmul.f32.gmra.mxu0 %v498
        %v520 = vpop.f32.mrf.mxu0
        %v521 = vadd.f32 0.0, %v520
        %522 = vdwg.mxu0
        %523 = vmatpush.msra.mxu0 0.0
        %524 = vmatpush.msra.mxu0 0.0
        %525 = vmatpush.msra.mxu0 0.0
        %526 = vmatpush.msra.mxu0 0.0
        %527 = vmatpush.msra.mxu0 0.0
        %528 = vmatpush.msra.mxu0 0.0
        %529 = vmatpush.msra.mxu0 0.0
        %530 = vmatpush.msra.mxu0 0.0
        %531 = vmatpush.msra.mxu0 0.0
        %532 = vmatpush.msra.mxu0 0.0
        %533 = vmatpush.msra.mxu0 0.0
        %534 = vmatpush.msra.mxu0 0.0
        %535 = vmatpush.msra.mxu0 0.0
        %536 = vmatpush.msra.mxu0 0.0
        %537 = vmatpush.msra.mxu0 %v486
        %538 = vmatpush.msra.mxu0 %v483
        %539 = vmatmul.f32.gmra.mxu0 %v495
        %v540 = vpop.f32.mrf.mxu0
        %v541 = vadd.f32 0.0, %v540
        %542 = vmatmul.f32.gmra.mxu0 %v498
        %v543 = vpop.f32.mrf.mxu0
        %v544 = vadd.f32 0.0, %v543
        %545 = vdwg.mxu0
        %546 = vmatpush.msra.mxu0 0.0
        %547 = vmatpush.msra.mxu0 0.0
        %548 = vmatpush.msra.mxu0 0.0
        %549 = vmatpush.msra.mxu0 0.0
        %550 = vmatpush.msra.mxu0 0.0
        %551 = vmatpush.msra.mxu0 0.0
        %552 = vmatpush.msra.mxu0 0.0
        %553 = vmatpush.msra.mxu0 0.0
        %554 = vmatpush.msra.mxu0 0.0
        %555 = vmatpush.msra.mxu0 0.0
        %556 = vmatpush.msra.mxu0 0.0
        %557 = vmatpush.msra.mxu0 0.0
        %558 = vmatpush.msra.mxu0 0.0
        %559 = vmatpush.msra.mxu0 0.0
        %560 = vmatpush.msra.mxu0 %v492
        %561 = vmatpush.msra.mxu0 %v489
        %562 = vmatmul.f32.gmra.mxu0 %v495
        %v563 = vpop.f32.mrf.mxu0
        %v564 = vadd.f32 0.0, %v563
        %565 = vmatmul.f32.gmra.mxu0 %v498
        %v566 = vpop.f32.mrf.mxu0
        %v567 = vadd.f32 0.0, %v566
        %568 = vdwg.mxu0
        %v569 = vmul.f32 %v518, %v518
        %v570 = vmul.f32 %v521, %v521
        %v571 = vsub.f32 %v541, %v569
        %v572 = vsub.f32 %v544, %v570
        %v573 = vld [vmem:[#allocation3] sm:$0xff]
        %v574 = vld [vmem:[#allocation3 + $0x8] sm:$0xff]
        %v575 = vmul.f32 %v573, %v518
        %v576 = vmul.f32 %v574, %v521
        %v577 = vsub.f32 %v564, %v575
        %v578 = vsub.f32 %v567, %v576
        %v579 = vmul.f32 %v577, 2.0
        %v580 = vmul.f32 %v578, 2.0
        %v581 = vadd.f32 %v579, 0.0009
        %v582 = vadd.f32 %v580, 0.0009
        %v583 = vld [vmem:[#allocation4] sm:$0xff]
        %v584 = vld [vmem:[#allocation4 + $0x8] sm:$0xff]
        %v585 = vadd.f32 %v583, %v571
        %v586 = vadd.f32 %v584, %v572
        %v587 = vadd.f32 %v585, 0.0009
        %v588 = vadd.f32 %v586, 0.0009
        %v589 = vrcp.pop %v587
        %v590 = vrcp.pop %v588
        %v591 = vmul.f32 %v581, %v589
        %v592 = vmul.f32 %v582, %v590
        %v593 = vld [vmem:[#allocation5] sm:$0xff]
        %v594 = vld [vmem:[#allocation5 + $0x8] sm:$0xff]
        %vm595 = vcmp.gt.f32.partialorder %v571, %v593
        %vm596 = vcmp.gt.f32.partialorder %v572, %v594
        %v597 = vld [vmem:[#allocation6] sm:$0xff]
        %v598 = vld [vmem:[#allocation6 + $0x8] sm:$0xff]
        %v599 = vsel %vm595, %v591, %v597
        %v600 = vsel %vm596, %v592, %v598
        %601 = vst.msk [vmem:[#allocation6] sm:$0xff] %vm428, %v599
        %602 = vst.msk [vmem:[#allocation6 + $0x8] sm:$0xff] %vm428, %v600
        %v603 = vld [vmem:[#allocation5] sm:$0xff]
        %v604 = vld [vmem:[#allocation5 + $0x8] sm:$0xff]
        %v605 = vsel %vm595, %v571, %v603
        %v606 = vsel %vm596, %v572, %v604
        %607 = vst.msk [vmem:[#allocation5] sm:$0xff] %vm428, %v605
        %608 = vst.msk [vmem:[#allocation5 + $0x8] sm:$0xff] %vm428, %v606
        %p609 = scmp.eq.s32.totalorder %s21, 2
        // Predicated region
        $region57: #{tpu_custom_call.1} parent=35 // pred_check
          %p610 = pneg %p609
        $region58: #{tpu_custom_call.1} parent=35 // pred_check_branch
          %612 = sbr.rel (%p610) target = $region60
        $region59: #{tpu_custom_call.1} parent=35 // pred_region
          %v613 = vld [vmem:[#allocation6] sm:$0xff]
          %v614 = vld [vmem:[#allocation6 + $0x8] sm:$0xff]
          %v615 = vsel %vm428, %v613, 0.0
          %v616 = vsel %vm428, %v614, 0.0
          %v617 = vadd.f32 %v615, %v616
          %618 = vadd.xlane.f32.xlu0 %v617
          %v619 = vpop.xlane.xlu0 %618
          %v620 = vrot.slane %v619, 4
          %v621 = vadd.f32 %v619, %v620
          %v622 = vrot.slane %v621, 2
          %v623 = vadd.f32 %v621, %v622
          %v624 = vrot.slane %v623, 1
          %v625 = vadd.f32 %v623, %v624
          %s626 = vtos %v625
          %s627 = smul.f32 %s626, 0.00390625
          %v628 = vstv %s627
          %vm629 = vcmask 0
          %630 = vst.msk [vmem:[#allocation15] sm:$0x1] %vm629, %v628
        $region60: #{tpu_custom_call.1} parent=35 // pred_fallthru
          _
        // Predicated region
        $region61: #{tpu_custom_call.1} parent=35 // pred_check
          %p631 = pneg %p123
        $region62: #{tpu_custom_call.1} parent=35 // pred_check_branch
          %633 = sbr.rel (%p631) target = $region64
        $region63: #{tpu_custom_call.1} parent=35 // pred_region
          %635 = vsyncadd [#allocation9], 0
          %s637 = sshll.u32 [#allocation15], 4
          %s638 = int_to_ptr.vmem [resolvable:$true] %s637
          %s639 = sshll.u32 %s4, 4
          %s640 = int_to_ptr.hbm [resolvable:$true] %s639
          %642 = dma.vmem_to_hbm [thread:$0]  %s638, 16, %s640, [#allocation9]
        $region64: #{tpu_custom_call.1} parent=35 // pred_fallthru
          _
        // Predicated region
        $region65: #{tpu_custom_call.1} parent=35 // pred_check
          %p643 = pneg %p123
        $region66: #{tpu_custom_call.1} parent=35 // pred_check_branch
          %645 = sbr.rel (%p643) target = $region68
        $region67: #{tpu_custom_call.1} parent=35 // pred_region
          %647 = dma.done [#allocation9], 16
        $region68: #{tpu_custom_call.1} parent=35 // pred_fallthru
          _
      $region36: #{tpu_custom_call.1} parent=5 // pred_fallthru
        _
      %p648 = scmp.le.s32.totalorder 2, %s16
      // Predicated region
      $region69: #{tpu_custom_call.1} parent=5 // pred_check
        %p649 = pneg %p648
      $region70: #{tpu_custom_call.1} parent=5 // pred_check_branch
        %651 = sbr.rel (%p649) target = $region72
      $region71: #{tpu_custom_call.1} parent=5 // pred_region
        %s652 = ssub.s32 %s16, 2
      $region72: #{tpu_custom_call.1} parent=5 // pred_fallthru
        _
    $region6: #{tpu_custom_call.1} parent=1 // loop_footer
      %s20 = sadd.s32 1, %s16
    $region7: #{tpu_custom_call.1} parent=1 // loop_footer_branch
      %15 = sbr.rel target = $region3
    $region8: #{tpu_custom_call.1} parent=1 // loop_exit
      _
    %653 = vsyncpa [#allocation8], 1
    %s654 = scalar_lea.sflag [#allocation8], 1
    %655 = vsyncpa %s654, 1
    %656 = vsyncpa [#allocation11], 1
    %s657 = scalar_lea.sflag [#allocation11], 1
    %658 = vsyncpa %s657, 1
    %659 = vsyncpa [#allocation14], 1
    %660 = vsyncpa [#allocation9], 1
    %s661 = scalar_lea.sflag [#allocation9], 1
    %662 = vsyncpa %s661, 1

</llo_original>
